<compile_context>
chip_gen: v5e
topology: v5e:2x2
jax: 0.10.0
libtpu: 0.0.40
codegen_flags: <defaults>
</compile_context>

<pallas_src>
import functools

import jax
import jax.numpy as jnp
from jax.experimental import pallas as pl
from jax.experimental.pallas import tpu as pltpu

BN_EPS = 1e-5
LEAKY_SLOPE = 0.1

# Conservative budget for the kernel's VMEM footprint so one tile choice works on
# v5e/v6e (128 MiB physical) and v7x (64 MiB physical).
VMEM_BUDGET_BYTES = 44 * 1024 * 1024
# Per-grid-step overhead (~0.35 us) expressed as bytes-equivalent of HBM traffic,
# used by the tile chooser to trade padded-F waste against step count.
_STEP_OVERHEAD_BYTES = 256 * 1024


def _round_up(n, m):
    return ((n + m - 1) // m) * m


def _estimate_vmem(b_pad, tf, nb_pad, c_pad):
    """Rough VMEM footprint (bytes) with default double-buffering."""
    streamed = 2 * (b_pad * tf * 4 + tf * nb_pad * 2 + 2 * tf * 4)   # x(f32), w1(bf16), g1+b1
    resident = 2 * (nb_pad * c_pad * 2 + 2 * nb_pad * 4)             # w2(bf16), g2+b2
    out_buf = 2 * b_pad * c_pad * 4
    acc = b_pad * nb_pad * 4
    return streamed + resident + out_buf + acc


def _choose_tile(f128, block_f, b_pad_hint, nb_pad, c_pad, vmem_budget):
    """Pick the K tile (multiple of 128) minimizing streamed bytes + step overhead
    subject to a VMEM budget. Returns (tF, F_pad) with F_pad a multiple of tF."""
    col_bytes = b_pad_hint * 4 + nb_pad * 2   # streamed bytes per F element (x + w1)
    cap = min(block_f, f128)
    best = None
    for cand in range(128, cap + 1, 128):
        if _estimate_vmem(b_pad_hint, cand, nb_pad, c_pad) > vmem_budget:
            break  # footprint only grows with cand
        f_pad = _round_up(f128, cand)
        steps = f_pad // cand
        score = f_pad * col_bytes + steps * _STEP_OVERHEAD_BYTES
        if best is None or score < best[0]:
            best = (score, cand, f_pad)
    if best is None:
        return 128, _round_up(f128, 128)
    return best[1], best[2]


def _make_kernel(b_valid, b_pad):
    """Kernel closure over static batch sizes (valid rows vs padded rows)."""
    need_row_mask = b_pad > b_valid
    inv_b = 1.0 / float(b_valid)

    def kernel(x_ref, g1_ref, b1_ref, w1_ref, g2_ref, b2_ref, w2_ref,
               out_ref, acc_ref):
        k = pl.program_id(0)
        nk = pl.num_programs(0)

        x = x_ref[...]  # f32 [B_pad, tF]; padded rows/cols are zero

        if need_row_mask:
            rowvalid = jax.lax.broadcasted_iota(jnp.int32, (b_pad, 1), 0) < b_valid
        else:
            rowvalid = None

        # --- BN1 (training-mode batch stats), two-pass, folded into one FMA ---
        mean1 = jnp.sum(x, axis=0, keepdims=True) * inv_b      # padded rows are zero
        xc = x - mean1
        xc_stat = jnp.where(rowvalid, xc, 0.0) if need_row_mask else xc
        var1 = jnp.sum(xc_stat * xc_stat, axis=0, keepdims=True) * inv_b
        scale1 = g1_ref[...] * jax.lax.rsqrt(var1 + BN_EPS)
        h = xc * scale1 + b1_ref[...]

        # --- LeakyReLU(0.1): mul + max ---
        h = jnp.maximum(h, LEAKY_SLOPE * h)

        # Zero padded rows so they do not pollute BN2 statistics downstream.
        if need_row_mask:
            h = jnp.where(rowvalid, h, 0.0)

        # --- Linear1 partial product (bf16 MXU inputs, f32 accumulation) ---
        partial = jnp.dot(h.astype(jnp.bfloat16), w1_ref[...],
                          preferred_element_type=jnp.float32)

        @pl.when(k == 0)
        def _():  # write directly: no zero-fill + read-modify-write on the first step
            acc_ref[...] = partial

        @pl.when(k != 0)
        def _():
            acc_ref[...] += partial

        @pl.when(k == nk - 1)
        def _():
            y = acc_ref[...]
            # --- BN2 (two-pass), folded into one FMA ---
            mean2 = jnp.sum(y, axis=0, keepdims=True) * inv_b   # padded rows of y are zero
            yc = y - mean2
            yc_stat = jnp.where(rowvalid, yc, 0.0) if need_row_mask else yc
            var2 = jnp.sum(yc_stat * yc_stat, axis=0, keepdims=True) * inv_b
            scale2 = g2_ref[...] * jax.lax.rsqrt(var2 + BN_EPS)
            y1 = yc * scale2 + b2_ref[...]
            # Padded rows of y1 are nonzero but the corresponding output rows are sliced off.
            out = jnp.dot(y1.astype(jnp.bfloat16), w2_ref[...],
                          preferred_element_type=jnp.float32)
            out_ref[...] = out.astype(out_ref.dtype)

    return kernel


def prepare_params(params, *, block_f=1024, batch_hint=128,
                   vmem_budget=VMEM_BUDGET_BYTES):
    """One-time parameter prep: choose the K tile and build padded/bf16 weights.

    Do this once per parameter set (not per forward call) so the weight
    pad/transpose/cast copies are not re-materialized in HBM every step.
    """
    assert block_f % 128 == 0 and block_f >= 128
    F = int(params["gamma1"].shape[0])
    NB = int(params["w1"].shape[0])
    C = int(params["w2"].shape[0])

    f128 = _round_up(F, 128)
    NB_pad = _round_up(NB, 128)
    C_pad = _round_up(C, 128)
    b_hint_pad = _round_up(max(int(batch_hint), 8), 8)

    tF, F_pad = _choose_tile(f128, block_f, b_hint_pad, NB_pad, C_pad, vmem_budget)

    g1 = jnp.pad(params["gamma1"].reshape(1, F).astype(jnp.float32),
                 ((0, 0), (0, F_pad - F)))
    b1 = jnp.pad(params["beta1"].reshape(1, F).astype(jnp.float32),
                 ((0, 0), (0, F_pad - F)))
    w1t = jnp.pad(params["w1"].T.astype(jnp.float32),
                  ((0, F_pad - F), (0, NB_pad - NB))).astype(jnp.bfloat16)
    g2 = jnp.pad(params["gamma2"].reshape(1, NB).astype(jnp.float32),
                 ((0, 0), (0, NB_pad - NB)))
    b2 = jnp.pad(params["beta2"].reshape(1, NB).astype(jnp.float32),
                 ((0, 0), (0, NB_pad - NB)))
    w2t = jnp.pad(params["w2"].T.astype(jnp.float32),
                  ((0, NB_pad - NB), (0, C_pad - C))).astype(jnp.bfloat16)

    padded = {"g1": g1, "b1": b1, "w1t": w1t, "g2": g2, "b2": b2, "w2t": w2t}
    meta = {"tF": tF, "F": F, "NB": NB, "C": C,
            "F_pad": F_pad, "NB_pad": NB_pad, "C_pad": C_pad}
    return padded, meta


@functools.partial(jax.jit, static_argnames=("tF", "class_num"))
def _class_block_forward_jit(x, g1, b1, w1t, g2, b2, w2t, *, tF, class_num):
    B, F = x.shape
    F_pad = g1.shape[1]
    NB_pad = w1t.shape[1]
    C_pad = w2t.shape[1]
    assert F_pad % tF == 0 and w2t.shape[0] == NB_pad

    B_pad = _round_up(max(B, 8), 8)
    if B == B_pad and F == F_pad:
        # Already (8,128)-aligned: avoid the extra HBM round trip on x.
        xp = x.astype(jnp.float32)
    else:
        xp = jnp.pad(x.astype(jnp.float32), ((0, B_pad - B), (0, F_pad - F)))

    # Explicit scoped-VMEM limit derived from the double-buffered tile footprint,
    # clamped so it stays inside v7x's 64 MiB physical VMEM.
    est = _estimate_vmem(B_pad, tF, NB_pad, C_pad)
    vmem_limit = int(min(max(est * 5 // 4 + (1 << 20), 16 << 20), 60 << 20))

    grid = (F_pad // tF,)

    out = pl.pallas_call(
        _make_kernel(B, B_pad),
        out_shape=jax.ShapeDtypeStruct((B_pad, C_pad), jnp.float32),
        grid_spec=pltpu.PrefetchScalarGridSpec(
            num_scalar_prefetch=0,
            grid=grid,
            in_specs=[
                pl.BlockSpec((B_pad, tF), lambda k: (0, k)),      # x tile (streamed)
                pl.BlockSpec((1, tF), lambda k: (0, k)),          # gamma1 tile
                pl.BlockSpec((1, tF), lambda k: (0, k)),          # beta1 tile
                pl.BlockSpec((tF, NB_pad), lambda k: (k, 0)),     # w1^T tile (streamed)
                pl.BlockSpec((1, NB_pad), lambda k: (0, 0)),      # gamma2 (resident)
                pl.BlockSpec((1, NB_pad), lambda k: (0, 0)),      # beta2 (resident)
                pl.BlockSpec((NB_pad, C_pad), lambda k: (0, 0)),  # w2^T (resident)
            ],
            out_specs=pl.BlockSpec((B_pad, C_pad), lambda k: (0, 0)),
            scratch_shapes=[pltpu.VMEM((B_pad, NB_pad), jnp.float32)],
        ),
        compiler_params=pltpu.CompilerParams(
            dimension_semantics=("arbitrary",),   # K axis is a reduction
            vmem_limit_bytes=vmem_limit,
        ),
    )(xp, g1, b1, w1t, g2, b2, w2t)

    return out[:B, :class_num]


def class_block_forward(x, padded, meta):
    """x: [B, input_dim]; (padded, meta) from prepare_params. Returns [B, class_num]."""
    return _class_block_forward_jit(
        x, padded["g1"], padded["b1"], padded["w1t"],
        padded["g2"], padded["b2"], padded["w2t"],
        tF=meta["tF"], class_num=meta["C"])


def init_params(key, input_dim, num_bottleneck, class_num):
    """Logical (unpadded, f32) parameters mirroring the PyTorch init."""
    k1, k2, k3, k4 = jax.random.split(key, 4)
    # BatchNorm1d: weights_init_kaiming -> gamma ~ N(1, 0.02), beta = 0
    gamma1 = 1.0 + 0.02 * jax.random.normal(k1, (input_dim,), jnp.float32)
    beta1 = jnp.zeros((input_dim,), jnp.float32)
    gamma2 = 1.0 + 0.02 * jax.random.normal(k2, (num_bottleneck,), jnp.float32)
    beta2 = jnp.zeros((num_bottleneck,), jnp.float32)
    # Linear1: kaiming_normal(a=0, mode='fan_out') -> std = sqrt(2 / out_features)
    std1 = (2.0 / num_bottleneck) ** 0.5
    w1 = std1 * jax.random.normal(k3, (num_bottleneck, input_dim), jnp.float32)
    # classifier Linear: normal(std=0.001)
    w2 = 0.001 * jax.random.normal(k4, (class_num, num_bottleneck), jnp.float32)
    return {"gamma1": gamma1, "beta1": beta1, "w1": w1,
            "gamma2": gamma2, "beta2": beta2, "w2": w2}


def reference_forward(x, params):
    """Pure-JAX reference mirroring the kernel's mixed precision (bf16 MXU, f32 math)."""
    x = x.astype(jnp.float32)
    mean1 = jnp.mean(x, axis=0, keepdims=True)
    var1 = jnp.mean((x - mean1) ** 2, axis=0, keepdims=True)
    scale1 = params["gamma1"][None, :] * jax.lax.rsqrt(var1 + BN_EPS)
    h = (x - mean1) * scale1 + params["beta1"][None, :]
    h = jnp.maximum(h, LEAKY_SLOPE * h)
    y = jnp.dot(h.astype(jnp.bfloat16), params["w1"].T.astype(jnp.bfloat16),
                preferred_element_type=jnp.float32)
    mean2 = jnp.mean(y, axis=0, keepdims=True)
    var2 = jnp.mean((y - mean2) ** 2, axis=0, keepdims=True)
    scale2 = params["gamma2"][None, :] * jax.lax.rsqrt(var2 + BN_EPS)
    y1 = (y - mean2) * scale2 + params["beta2"][None, :]
    return jnp.dot(y1.astype(jnp.bfloat16), params["w2"].T.astype(jnp.bfloat16),
                   preferred_element_type=jnp.float32)


if __name__ == "__main__":
    key = jax.random.PRNGKey(0)
    kx1, kp1, kx2, kp2 = jax.random.split(key, 4)

    # Test 1: aligned shapes; block_f=128 forces a 2-step K grid (exercises accumulation).
    B, INPUT_DIM, NUM_BOTTLENECK, CLASS_NUM = 16, 256, 128, 16
    x = jax.random.normal(kx1, (B, INPUT_DIM), jnp.float32)
    params = init_params(kp1, INPUT_DIM, NUM_BOTTLENECK, CLASS_NUM)
    padded, meta = prepare_params(params, block_f=128, batch_hint=B)
    out = jax.block_until_ready(class_block_forward(x, padded, meta))
    ref = reference_forward(x, params)
    assert out.shape == (B, CLASS_NUM)
    assert jnp.allclose(out, ref, atol=2e-4, rtol=2e-2), "test1 mismatch vs. reference"

    # Test 2: unaligned shapes (exercises batch/feature padding + row masking),
    # default block_f collapses the grid to a single step.
    B2, F2, NB2, C2 = 10, 200, 96, 11
    x2 = jax.random.normal(kx2, (B2, F2), jnp.float32)
    params2 = init_params(kp2, F2, NB2, C2)
    padded2, meta2 = prepare_params(params2, batch_hint=B2)
    out2 = jax.block_until_ready(class_block_forward(x2, padded2, meta2))
    ref2 = reference_forward(x2, params2)
    assert out2.shape == (B2, C2)
    assert jnp.allclose(out2, ref2, atol=2e-4, rtol=2e-2), "test2 mismatch vs. reference"

    print("KERNEL_OK")
</pallas_src>

<mosaic_0001>
module attributes {stable_mosaic.version = 11 : i64} {
  func.func @kernel(%arg0: i32, %arg1: memref<16x128xf32, #tpu.memory_space<vmem>>, %arg2: memref<1x128xf32, #tpu.memory_space<vmem>>, %arg3: memref<1x128xf32, #tpu.memory_space<vmem>>, %arg4: memref<128x128xbf16, #tpu.memory_space<vmem>>, %arg5: memref<1x128xf32, #tpu.memory_space<vmem>>, %arg6: memref<1x128xf32, #tpu.memory_space<vmem>>, %arg7: memref<128x128xbf16, #tpu.memory_space<vmem>>, %arg8: memref<16x128xf32, #tpu.memory_space<vmem>>, %arg9: memref<16x128xf32, #tpu.memory_space<vmem>>) attributes {dimension_semantics = [#tpu.dimension_semantics<arbitrary>], iteration_bounds = array<i64: 2>, scalar_prefetch = 0 : i64, scratch_operands = 1 : i64, tpu.core_type = #tpu.core_type<tc>, window_params = [{transform_indices = @transform_0, window_bounds = array<i64: 16, 128>}, {transform_indices = @transform_1, window_bounds = array<i64: 1, 128>}, {transform_indices = @transform_2, window_bounds = array<i64: 1, 128>}, {transform_indices = @transform_3, window_bounds = array<i64: 128, 128>}, {pipeline_mode = #tpu.pipeline_mode<synchronous>, transform_indices = @transform_4, window_bounds = array<i64: 1, 128>}, {pipeline_mode = #tpu.pipeline_mode<synchronous>, transform_indices = @transform_5, window_bounds = array<i64: 1, 128>}, {pipeline_mode = #tpu.pipeline_mode<synchronous>, transform_indices = @transform_6, window_bounds = array<i64: 128, 128>}, {pipeline_mode = #tpu.pipeline_mode<synchronous>, transform_indices = @transform_7, window_bounds = array<i64: 16, 128>}]} {
    %c0 = arith.constant 0 : index
    %c0_0 = arith.constant 0 : index
    %0 = vector.load %arg1[%c0, %c0_0] : memref<16x128xf32, #tpu.memory_space<vmem>>, vector<16x128xf32>
    %cst = arith.constant dense<0.000000e+00> : vector<128xf32>
    %1 = vector.multi_reduction <add>, %0, %cst [0] : vector<16x128xf32> to vector<128xf32>
    %2 = vector.shape_cast %1 : vector<128xf32> to vector<1x128xf32>
    %cst_1 = arith.constant 6.250000e-02 : f32
    %3 = vector.broadcast %cst_1 : f32 to vector<1x128xf32>
    %4 = arith.mulf %2, %3 : vector<1x128xf32>
    %5 = vector.broadcast %4 : vector<1x128xf32> to vector<16x128xf32>
    %6 = arith.subf %0, %5 : vector<16x128xf32>
    %7 = arith.mulf %6, %6 : vector<16x128xf32>
    %cst_2 = arith.constant dense<0.000000e+00> : vector<128xf32>
    %8 = vector.multi_reduction <add>, %7, %cst_2 [0] : vector<16x128xf32> to vector<128xf32>
    %9 = vector.shape_cast %8 : vector<128xf32> to vector<1x128xf32>
    %cst_3 = arith.constant 6.250000e-02 : f32
    %10 = vector.broadcast %cst_3 : f32 to vector<1x128xf32>
    %11 = arith.mulf %9, %10 : vector<1x128xf32>
    %c0_4 = arith.constant 0 : index
    %c0_5 = arith.constant 0 : index
    %12 = vector.load %arg2[%c0_4, %c0_5] : memref<1x128xf32, #tpu.memory_space<vmem>>, vector<1x128xf32>
    %cst_6 = arith.constant 9.99999974E-6 : f32
    %13 = vector.broadcast %cst_6 : f32 to vector<1x128xf32>
    %14 = arith.addf %11, %13 : vector<1x128xf32>
    %15 = math.rsqrt %14 : vector<1x128xf32>
    %16 = arith.mulf %12, %15 : vector<1x128xf32>
    %17 = vector.broadcast %16 : vector<1x128xf32> to vector<16x128xf32>
    %18 = arith.mulf %6, %17 : vector<16x128xf32>
    %c0_7 = arith.constant 0 : index
    %c0_8 = arith.constant 0 : index
    %19 = vector.load %arg3[%c0_7, %c0_8] : memref<1x128xf32, #tpu.memory_space<vmem>>, vector<1x128xf32>
    %20 = vector.broadcast %19 : vector<1x128xf32> to vector<16x128xf32>
    %21 = arith.addf %18, %20 : vector<16x128xf32>
    %cst_9 = arith.constant 1.000000e-01 : f32
    %22 = vector.broadcast %cst_9 : f32 to vector<16x128xf32>
    %23 = arith.mulf %22, %21 : vector<16x128xf32>
    %24 = arith.maximumf %21, %23 : vector<16x128xf32>
    %25 = arith.truncf %24 : vector<16x128xf32> to vector<16x128xbf16>
    %c0_10 = arith.constant 0 : index
    %c0_11 = arith.constant 0 : index
    %26 = vector.load %arg4[%c0_10, %c0_11] : memref<128x128xbf16, #tpu.memory_space<vmem>>, vector<128x128xbf16>
    %cst_12 = arith.constant dense<0.000000e+00> : vector<16x128xf32>
    %27 = tpu.matmul %25, %26, %cst_12 {dimension_numbers = #tpu.dot_dimension_numbers<[1], [0], [0], [1], [0, 0, 1, 1], [], []>} : vector<16x128xbf16>, vector<128x128xbf16>, vector<16x128xf32> -> vector<16x128xf32>
    %c0_i32 = arith.constant 0 : i32
    %28 = arith.cmpi eq, %arg0, %c0_i32 : i32
    %29 = arith.extui %28 : i1 to i32
    %c0_i32_13 = arith.constant 0 : i32
    %30 = arith.cmpi ne, %29, %c0_i32_13 : i32
    scf.if %30 {
      %c0_17 = arith.constant 0 : index
      %c0_18 = arith.constant 0 : index
      %37 = vector.load %arg9[%c0_17, %c0_18] : memref<16x128xf32, #tpu.memory_space<vmem>>, vector<16x128xf32>
      tpu.vector_store %arg9[%c0_17, %c0_18], %27 {strides = array<i32>} : memref<16x128xf32, #tpu.memory_space<vmem>>, vector<16x128xf32>,
    } else {
    }
    %c0_i32_14 = arith.constant 0 : i32
    %31 = arith.cmpi ne, %arg0, %c0_i32_14 : i32
    %32 = arith.extui %31 : i1 to i32
    %c0_i32_15 = arith.constant 0 : i32
    %33 = arith.cmpi ne, %32, %c0_i32_15 : i32
    scf.if %33 {
      %c0_17 = arith.constant 0 : index
      %c0_18 = arith.constant 0 : index
      %37 = vector.load %arg9[%c0_17, %c0_18] : memref<16x128xf32, #tpu.memory_space<vmem>>, vector<16x128xf32>
      %38 = arith.addf %37, %27 : vector<16x128xf32>
      %c0_19 = arith.constant 0 : index
      %c0_20 = arith.constant 0 : index
      %39 = vector.load %arg9[%c0_19, %c0_20] : memref<16x128xf32, #tpu.memory_space<vmem>>, vector<16x128xf32>
      tpu.vector_store %arg9[%c0_19, %c0_20], %38 {strides = array<i32>} : memref<16x128xf32, #tpu.memory_space<vmem>>, vector<16x128xf32>,
    } else {
    }
    %c1_i32 = arith.constant 1 : i32
    %34 = arith.cmpi eq, %arg0, %c1_i32 : i32
    %35 = arith.extui %34 : i1 to i32
    %c0_i32_16 = arith.constant 0 : i32
    %36 = arith.cmpi ne, %35, %c0_i32_16 : i32
    scf.if %36 {
      %c0_17 = arith.constant 0 : index
      %c0_18 = arith.constant 0 : index
      %37 = vector.load %arg9[%c0_17, %c0_18] : memref<16x128xf32, #tpu.memory_space<vmem>>, vector<16x128xf32>
      %cst_19 = arith.constant dense<0.000000e+00> : vector<128xf32>
      %38 = vector.multi_reduction <add>, %37, %cst_19 [0] : vector<16x128xf32> to vector<128xf32>
      %39 = vector.shape_cast %38 : vector<128xf32> to vector<1x128xf32>
      %cst_20 = arith.constant 6.250000e-02 : f32
      %40 = vector.broadcast %cst_20 : f32 to vector<1x128xf32>
      %41 = arith.mulf %39, %40 : vector<1x128xf32>
      %42 = vector.broadcast %41 : vector<1x128xf32> to vector<16x128xf32>
      %43 = arith.subf %37, %42 : vector<16x128xf32>
      %44 = arith.mulf %43, %43 : vector<16x128xf32>
      %cst_21 = arith.constant dense<0.000000e+00> : vector<128xf32>
      %45 = vector.multi_reduction <add>, %44, %cst_21 [0] : vector<16x128xf32> to vector<128xf32>
      %46 = vector.shape_cast %45 : vector<128xf32> to vector<1x128xf32>
      %cst_22 = arith.constant 6.250000e-02 : f32
      %47 = vector.broadcast %cst_22 : f32 to vector<1x128xf32>
      %48 = arith.mulf %46, %47 : vector<1x128xf32>
      %c0_23 = arith.constant 0 : index
      %c0_24 = arith.constant 0 : index
      %49 = vector.load %arg5[%c0_23, %c0_24] : memref<1x128xf32, #tpu.memory_space<vmem>>, vector<1x128xf32>
      %cst_25 = arith.constant 9.99999974E-6 : f32
      %50 = vector.broadcast %cst_25 : f32 to vector<1x128xf32>
      %51 = arith.addf %48, %50 : vector<1x128xf32>
      %52 = math.rsqrt %51 : vector<1x128xf32>
      %53 = arith.mulf %49, %52 : vector<1x128xf32>
      %54 = vector.broadcast %53 : vector<1x128xf32> to vector<16x128xf32>
      %55 = arith.mulf %43, %54 : vector<16x128xf32>
      %c0_26 = arith.constant 0 : index
      %c0_27 = arith.constant 0 : index
      %56 = vector.load %arg6[%c0_26, %c0_27] : memref<1x128xf32, #tpu.memory_space<vmem>>, vector<1x128xf32>
      %57 = vector.broadcast %56 : vector<1x128xf32> to vector<16x128xf32>
      %58 = arith.addf %55, %57 : vector<16x128xf32>
      %59 = arith.truncf %58 : vector<16x128xf32> to vector<16x128xbf16>
      %c0_28 = arith.constant 0 : index
      %c0_29 = arith.constant 0 : index
      %60 = vector.load %arg7[%c0_28, %c0_29] : memref<128x128xbf16, #tpu.memory_space<vmem>>, vector<128x128xbf16>
      %cst_30 = arith.constant dense<0.000000e+00> : vector<16x128xf32>
      %61 = tpu.matmul %59, %60, %cst_30 {dimension_numbers = #tpu.dot_dimension_numbers<[1], [0], [0], [1], [0, 0, 1, 1], [], []>} : vector<16x128xbf16>, vector<128x128xbf16>, vector<16x128xf32> -> vector<16x128xf32>
      %c0_31 = arith.constant 0 : index
      %c0_32 = arith.constant 0 : index
      %62 = vector.load %arg8[%c0_31, %c0_32] : memref<16x128xf32, #tpu.memory_space<vmem>>, vector<16x128xf32>
      tpu.vector_store %arg8[%c0_31, %c0_32], %61 {strides = array<i32>} : memref<16x128xf32, #tpu.memory_space<vmem>>, vector<16x128xf32>,
    } else {
    }
    return
  }
  func.func @transform_0(%arg0: i32) -> (i32, i32) {
    %c0_i32 = arith.constant 0 : i32
    %c0_i32_0 = arith.constant 0 : i32
    return %c0_i32, %arg0 : i32, i32
  }
  func.func @transform_1(%arg0: i32) -> (i32, i32) {
    %c0_i32 = arith.constant 0 : i32
    %c0_i32_0 = arith.constant 0 : i32
    return %c0_i32, %arg0 : i32, i32
  }
  func.func @transform_2(%arg0: i32) -> (i32, i32) {
    %c0_i32 = arith.constant 0 : i32
    %c0_i32_0 = arith.constant 0 : i32
    return %c0_i32, %arg0 : i32, i32
  }
  func.func @transform_3(%arg0: i32) -> (i32, i32) {
    %c0_i32 = arith.constant 0 : i32
    %c0_i32_0 = arith.constant 0 : i32
    return %arg0, %c0_i32 : i32, i32
  }
  func.func @transform_4(%arg0: i32) -> (i32, i32) {
    %c0_i32 = arith.constant 0 : i32
    %c0_i32_0 = arith.constant 0 : i32
    %c0_i32_1 = arith.constant 0 : i32
    return %c0_i32, %c0_i32_0 : i32, i32
  }
  func.func @transform_5(%arg0: i32) -> (i32, i32) {
    %c0_i32 = arith.constant 0 : i32
    %c0_i32_0 = arith.constant 0 : i32
    %c0_i32_1 = arith.constant 0 : i32
    return %c0_i32, %c0_i32_0 : i32, i32
  }
  func.func @transform_6(%arg0: i32) -> (i32, i32) {
    %c0_i32 = arith.constant 0 : i32
    %c0_i32_0 = arith.constant 0 : i32
    %c0_i32_1 = arith.constant 0 : i32
    return %c0_i32, %c0_i32_0 : i32, i32
  }
  func.func @transform_7(%arg0: i32) -> (i32, i32) {
    %c0_i32 = arith.constant 0 : i32
    %c0_i32_0 = arith.constant 0 : i32
    %c0_i32_1 = arith.constant 0 : i32
    return %c0_i32, %c0_i32_0 : i32, i32
  }
}

</mosaic_0001>

<llo_original>
// kernel: _class_block_forward_jit.1
$region0: #{_class_block_forward_jit.1}
  #allocation0 [shape = 'u32[]', space=smem, size = 0x4, offset = 0x4, fixed_abs, tag = 'smem constant byte address 0x4 - core index']
  #allocation1 [shape = 'u32[72,128]{1,0:T(1,128)}', space=vmem, size = 0x9000, scoped, tag = 'internal scratch']
  #allocation2 [shape = 'f32[16,128]{1,0:T(8,128)}', space=vmem, size = 0x2000, scoped, tag = 'scratch operand']
  %s0 = inlined_call_operand.hbm [shape: f32[16,256], index: 0, kind: input, shape index: {}]
  %s1 = inlined_call_operand.hbm [shape: f32[1,256], index: 1, kind: input, shape index: {}]
  %s2 = inlined_call_operand.hbm [shape: f32[1,256], index: 2, kind: input, shape index: {}]
  %s3 = inlined_call_operand.hbm [shape: bf16[256,128], index: 3, kind: input, shape index: {}]
  %s4 = inlined_call_operand.vmem [shape: f32[1,128], index: 4, kind: input, shape index: {}]
  %s5 = inlined_call_operand.vmem [shape: f32[1,128], index: 5, kind: input, shape index: {}]
  %s6 = inlined_call_operand.hbm [shape: bf16[128,128], index: 6, kind: input, shape index: {}]
  %s7 = inlined_call_operand.hbm [shape: f32[16,128], index: 7, kind: output, shape index: {}]
  %s8 = sld [smem:[#allocation0]]
  $region93: #{_class_block_forward_jit.1} parent=0
    _
  %s10 = ssub.s32 1, %s8
  %s11 = scalar_select 0, %s10, %s8
  $region1: #{_class_block_forward_jit.1} parent=0
    #allocation3 [shape = 'u8[16384]{0}', space=vmem, size = 0x4000, scoped, tag = 'input window, operand 0']
    #allocation4 [shape = 's32[2]{0}', space=sflag, size = 0x8, scoped, tag = 'scoped memory for _class_block_forward_jit.1']
    #allocation5 [shape = 's32[2]{0}', space=sflag, size = 0x8, scoped, tag = 'scoped memory for _class_block_forward_jit.1']
    #allocation6 [shape = 'u8[1024]{0}', space=vmem, size = 0x400, scoped, tag = 'input window, operand 1']
    #allocation7 [shape = 's32[2]{0}', space=sflag, size = 0x8, scoped, tag = 'scoped memory for _class_block_forward_jit.1']
    #allocation8 [shape = 'u8[1024]{0}', space=vmem, size = 0x400, scoped, tag = 'input window, operand 2']
    #allocation9 [shape = 'u8[65536]{0}', space=vmem, size = 0x10000, scoped, tag = 'input window, operand 3']
    #allocation10 [shape = 's32[2]{0}', space=sflag, size = 0x8, scoped, tag = 'scoped memory for _class_block_forward_jit.1']
    #allocation11 [shape = 'u8[32768]{0}', space=vmem, size = 0x8000, scoped, tag = 'input window, operand 6, single buffered']
    #allocation12 [shape = 'u8[8192]{0}', space=vmem, size = 0x2000, scoped, tag = 'output window, operand 0, single buffered']
    %12 = vsyncpa [#allocation4], 0
    %s13 = scalar_lea.sflag [#allocation4], 1
    %14 = vsyncpa %s13, 0
    %15 = vsyncpa [#allocation7], 0
    %s16 = scalar_lea.sflag [#allocation7], 1
    %17 = vsyncpa %s16, 0
    %18 = vsyncpa [#allocation10], 0
    %s19 = scalar_lea.sflag [#allocation10], 1
    %20 = vsyncpa %s19, 0
    %21 = vsyncpa [#allocation5], 0
    loop: start=0, step=1, limit=4
    $region2: #{_class_block_forward_jit.1} parent=1 // loop_pre_header
      _
    $region3: #{_class_block_forward_jit.1} parent=1 // loop_header
      %s23 = sphi 0, %s27
      %p24 = scmp.ge.s32.totalorder %s23, 4
      %s33 = sphi 0, %s35
      %s36 = sphi 0, %s33
      %s37 = sphi 0, %s36
      %s53 = sphi 0, %s37
      %s59 = sphi 0, %s61
      %s62 = sphi 0, %s59
      %s63 = sphi 0, %s62
      %s79 = sphi 0, %s63
      %s85 = sphi 0, %s87
      %s88 = sphi 0, %s85
      %s89 = sphi 0, %s88
      %s105 = sphi 0, %s89
      %s111 = sphi 0, %s113
      %s114 = sphi 0, %s111
      %s115 = sphi 0, %s114
      %s131 = sphi 0, %s115
      %s135 = sphi 0, %s135
      %s137 = sphi 0, %s135
      %s138 = sphi 0, %s137
      %s152 = sphi 0, %s138
      %s156 = sphi 0, %s156
      %s158 = sphi 0, %s156
      %s159 = sphi 0, %s158
      %s173 = sphi 0, %s159
      %s177 = sphi 0, %s177
      %s179 = sphi 0, %s177
      %s180 = sphi 0, %s179
      %s194 = sphi 0, %s180
      %s198 = sphi 0, %s198
      %s200 = sphi 0, %s198
      %s201 = sphi 0, %s200
      %s215 = sphi 0, %s201
    $region4: #{_class_block_forward_jit.1} parent=1 // loop_header_branch
      %26 = sbr.rel (%p24) target = $region8
    $region5: #{_class_block_forward_jit.1} parent=1 // loop_body
      %s28 = ssub.s32 %s23, 1
      %s29 = ssub.s32 %s23, 2
      %s30 = sadd.s32 %s23, 1
      %s31 = ssub.s32 %s23, %s30
      %p32 = scmp.eq.s32.totalorder %s31, 0
      %s34 = sadd.s32 %s33, 1
      %s35 = scalar_select %p32, %s33, %s34
      %p38 = pneg %p32
      %p39 = scmp.eq.s32.totalorder %s23, 1
      %p40 = por %p38, %p39
      %p41 = scmp.ne.s32.totalorder %s33, %s36
      %p42 = scmp.eq.s32.totalorder %s23, 0
      %p43 = por %p41, %p42
      %p44 = scmp.ne.s32.totalorder %s33, %s36
      %p45 = scmp.eq.s32.totalorder %s28, 1
      %p46 = por %p44, %p45
      %p47 = scmp.ne.s32.totalorder %s36, %s37
      %p48 = scmp.eq.s32.totalorder %s28, 0
      %p49 = por %p47, %p48
      %p50 = scmp.ne.s32.totalorder %s36, %s37
      %p51 = scmp.eq.s32.totalorder %s29, 1
      %p52 = por %p50, %p51
      %p54 = scmp.ne.s32.totalorder %s37, %s53
      %p55 = scmp.eq.s32.totalorder %s29, 0
      %p56 = por %p54, %p55
      %s57 = ssub.s32 %s23, %s30
      %p58 = scmp.eq.s32.totalorder %s57, 0
      %s60 = sadd.s32 %s59, 1
      %s61 = scalar_select %p58, %s59, %s60
      %p64 = pneg %p58
      %p65 = scmp.eq.s32.totalorder %s23, 1
      %p66 = por %p64, %p65
      %p67 = scmp.ne.s32.totalorder %s59, %s62
      %p68 = scmp.eq.s32.totalorder %s23, 0
      %p69 = por %p67, %p68
      %p70 = scmp.ne.s32.totalorder %s59, %s62
      %p71 = scmp.eq.s32.totalorder %s28, 1
      %p72 = por %p70, %p71
      %p73 = scmp.ne.s32.totalorder %s62, %s63
      %p74 = scmp.eq.s32.totalorder %s28, 0
      %p75 = por %p73, %p74
      %p76 = scmp.ne.s32.totalorder %s62, %s63
      %p77 = scmp.eq.s32.totalorder %s29, 1
      %p78 = por %p76, %p77
      %p80 = scmp.ne.s32.totalorder %s63, %s79
      %p81 = scmp.eq.s32.totalorder %s29, 0
      %p82 = por %p80, %p81
      %s83 = ssub.s32 %s23, %s30
      %p84 = scmp.eq.s32.totalorder %s83, 0
      %s86 = sadd.s32 %s85, 1
      %s87 = scalar_select %p84, %s85, %s86
      %p90 = pneg %p84
      %p91 = scmp.eq.s32.totalorder %s23, 1
      %p92 = por %p90, %p91
      %p93 = scmp.ne.s32.totalorder %s85, %s88
      %p94 = scmp.eq.s32.totalorder %s23, 0
      %p95 = por %p93, %p94
      %p96 = scmp.ne.s32.totalorder %s85, %s88
      %p97 = scmp.eq.s32.totalorder %s28, 1
      %p98 = por %p96, %p97
      %p99 = scmp.ne.s32.totalorder %s88, %s89
      %p100 = scmp.eq.s32.totalorder %s28, 0
      %p101 = por %p99, %p100
      %p102 = scmp.ne.s32.totalorder %s88, %s89
      %p103 = scmp.eq.s32.totalorder %s29, 1
      %p104 = por %p102, %p103
      %p106 = scmp.ne.s32.totalorder %s89, %s105
      %p107 = scmp.eq.s32.totalorder %s29, 0
      %p108 = por %p106, %p107
      %s109 = ssub.s32 %s23, %s30
      %p110 = scmp.eq.s32.totalorder %s109, 0
      %s112 = sadd.s32 %s111, 1
      %s113 = scalar_select %p110, %s111, %s112
      %p116 = pneg %p110
      %p117 = scmp.eq.s32.totalorder %s23, 1
      %p118 = por %p116, %p117
      %p119 = scmp.ne.s32.totalorder %s111, %s114
      %p120 = scmp.eq.s32.totalorder %s23, 0
      %p121 = por %p119, %p120
      %p122 = scmp.ne.s32.totalorder %s111, %s114
      %p123 = scmp.eq.s32.totalorder %s28, 1
      %p124 = por %p122, %p123
      %p125 = scmp.ne.s32.totalorder %s114, %s115
      %p126 = scmp.eq.s32.totalorder %s28, 0
      %p127 = por %p125, %p126
      %p128 = scmp.ne.s32.totalorder %s114, %s115
      %p129 = scmp.eq.s32.totalorder %s29, 1
      %p130 = por %p128, %p129
      %p132 = scmp.ne.s32.totalorder %s115, %s131
      %p133 = scmp.eq.s32.totalorder %s29, 0
      %p134 = por %p132, %p133
      %s136 = sadd.s32 %s135, 1
      %p139 = scmp.eq.s32.totalorder %s23, 1
      %p140 = scmp.ne.s32.totalorder %s135, %s137
      %p141 = scmp.eq.s32.totalorder %s23, 0
      %p142 = por %p140, %p141
      %p143 = scmp.ne.s32.totalorder %s135, %s137
      %p144 = scmp.eq.s32.totalorder %s28, 1
      %p145 = por %p143, %p144
      %p146 = scmp.ne.s32.totalorder %s137, %s138
      %p147 = scmp.eq.s32.totalorder %s28, 0
      %p148 = por %p146, %p147
      %p149 = scmp.ne.s32.totalorder %s137, %s138
      %p150 = scmp.eq.s32.totalorder %s29, 1
      %p151 = por %p149, %p150
      %p153 = scmp.ne.s32.totalorder %s138, %s152
      %p154 = scmp.eq.s32.totalorder %s29, 0
      %p155 = por %p153, %p154
      %s157 = sadd.s32 %s156, 1
      %p160 = scmp.eq.s32.totalorder %s23, 1
      %p161 = scmp.ne.s32.totalorder %s156, %s158
      %p162 = scmp.eq.s32.totalorder %s23, 0
      %p163 = por %p161, %p162
      %p164 = scmp.ne.s32.totalorder %s156, %s158
      %p165 = scmp.eq.s32.totalorder %s28, 1
      %p166 = por %p164, %p165
      %p167 = scmp.ne.s32.totalorder %s158, %s159
      %p168 = scmp.eq.s32.totalorder %s28, 0
      %p169 = por %p167, %p168
      %p170 = scmp.ne.s32.totalorder %s158, %s159
      %p171 = scmp.eq.s32.totalorder %s29, 1
      %p172 = por %p170, %p171
      %p174 = scmp.ne.s32.totalorder %s159, %s173
      %p175 = scmp.eq.s32.totalorder %s29, 0
      %p176 = por %p174, %p175
      %s178 = sadd.s32 %s177, 1
      %p181 = scmp.eq.s32.totalorder %s23, 1
      %p182 = scmp.ne.s32.totalorder %s177, %s179
      %p183 = scmp.eq.s32.totalorder %s23, 0
      %p184 = por %p182, %p183
      %p185 = scmp.ne.s32.totalorder %s177, %s179
      %p186 = scmp.eq.s32.totalorder %s28, 1
      %p187 = por %p185, %p186
      %p188 = scmp.ne.s32.totalorder %s179, %s180
      %p189 = scmp.eq.s32.totalorder %s28, 0
      %p190 = por %p188, %p189
      %p191 = scmp.ne.s32.totalorder %s179, %s180
      %p192 = scmp.eq.s32.totalorder %s29, 1
      %p193 = por %p191, %p192
      %p195 = scmp.ne.s32.totalorder %s180, %s194
      %p196 = scmp.eq.s32.totalorder %s29, 0
      %p197 = por %p195, %p196
      %s199 = sadd.s32 %s198, 1
      %p202 = scmp.eq.s32.totalorder %s23, 1
      %p203 = scmp.ne.s32.totalorder %s198, %s200
      %p204 = scmp.eq.s32.totalorder %s23, 0
      %p205 = por %p203, %p204
      %p206 = scmp.ne.s32.totalorder %s198, %s200
      %p207 = scmp.eq.s32.totalorder %s28, 1
      %p208 = por %p206, %p207
      %p209 = scmp.ne.s32.totalorder %s200, %s201
      %p210 = scmp.eq.s32.totalorder %s28, 0
      %p211 = por %p209, %p210
      %p212 = scmp.ne.s32.totalorder %s200, %s201
      %p213 = scmp.eq.s32.totalorder %s29, 1
      %p214 = por %p212, %p213
      %p216 = scmp.ne.s32.totalorder %s201, %s215
      %p217 = scmp.eq.s32.totalorder %s29, 0
      %p218 = por %p216, %p217
      %p219 = scmp.le.s32.totalorder 1, %s23
      %p220 = scmp.lt.s32.totalorder %s23, 3
      %p221 = pnand %p219, %p220
      %p222 = pneg %p221
      // Predicated region
      $region9: #{_class_block_forward_jit.1} parent=5 // pred_check
        _
      $region10: #{_class_block_forward_jit.1} parent=5 // pred_check_branch
        %224 = sbr.rel (%p221) target = $region12
      $region11: #{_class_block_forward_jit.1} parent=5 // pred_region
        %s225 = ssub.s32 %s23, 1
        // Predicated region
        $region13: #{_class_block_forward_jit.1} parent=11 // pred_check
          %p226 = pneg %p148
        $region14: #{_class_block_forward_jit.1} parent=11 // pred_check_branch
          %228 = sbr.rel (%p226) target = $region16
        $region15: #{_class_block_forward_jit.1} parent=11 // pred_region
          _
        $region16: #{_class_block_forward_jit.1} parent=11 // pred_fallthru
          _
        // Predicated region
        $region17: #{_class_block_forward_jit.1} parent=11 // pred_check
          %p229 = pneg %p169
        $region18: #{_class_block_forward_jit.1} parent=11 // pred_check_branch
          %231 = sbr.rel (%p229) target = $region20
        $region19: #{_class_block_forward_jit.1} parent=11 // pred_region
          _
        $region20: #{_class_block_forward_jit.1} parent=11 // pred_fallthru
          _
        // Predicated region
        $region21: #{_class_block_forward_jit.1} parent=11 // pred_check
          %p232 = pneg %p190
        $region22: #{_class_block_forward_jit.1} parent=11 // pred_check_branch
          %234 = sbr.rel (%p232) target = $region24
        $region23: #{_class_block_forward_jit.1} parent=11 // pred_region
          %236 = vsyncadd [#allocation10], 0
          %s237 = sshll.u32 %s6, 4
          %s238 = int_to_ptr.hbm [resolvable:$true] %s237
          %s239 = sshll.u32 [#allocation11], 4
          %s240 = int_to_ptr.vmem [resolvable:$true] %s239
          %245 = dma.hbm_to_vmem [thread:$0]  %s238, 1024, %s240, [#allocation10], 64, 64, 4
        $region24: #{_class_block_forward_jit.1} parent=11 // pred_fallthru
          _
      $region12: #{_class_block_forward_jit.1} parent=5 // pred_fallthru
        _
      %p246 = scmp.lt.s32.totalorder %s23, 2
      // Predicated region
      $region25: #{_class_block_forward_jit.1} parent=5 // pred_check
        %p247 = pneg %p246
      $region26: #{_class_block_forward_jit.1} parent=5 // pred_check_branch
        %249 = sbr.rel (%p247) target = $region28
      $region27: #{_class_block_forward_jit.1} parent=5 // pred_region
        // Predicated region
        $region29: #{_class_block_forward_jit.1} parent=27 // pred_check
          %p250 = pneg %p43
        $region30: #{_class_block_forward_jit.1} parent=27 // pred_check_branch
          %252 = sbr.rel (%p250) target = $region32
        $region31: #{_class_block_forward_jit.1} parent=27 // pred_region
          %s253 = sand.u32 %s33, 1
          %s254 = scalar_lea.sflag [#allocation4], %s253
          %s255 = sand.u32 %s33, 1
          %s256 = smul.addr %s255, 16
          %s257 = scalar_lea.vmem [#allocation3], %s256
          %259 = vsyncadd %s254, 0
          %s260 = smul.addr %s23, 8
          %s261 = scalar_lea.hbm %s0, %s260
          %s262 = sshll.u32 %s261, 4
          %s263 = int_to_ptr.hbm [resolvable:$true] %s262
          %s264 = sshll.u32 %s257, 4
          %s265 = int_to_ptr.vmem [resolvable:$true] %s264
          %270 = dma.hbm_to_vmem [thread:$0]  %s263, 256, %s265, %s254, 256, 128, 8
        $region32: #{_class_block_forward_jit.1} parent=27 // pred_fallthru
          _
        // Predicated region
        $region33: #{_class_block_forward_jit.1} parent=27 // pred_check
          %p271 = pneg %p69
        $region34: #{_class_block_forward_jit.1} parent=27 // pred_check_branch
          %273 = sbr.rel (%p271) target = $region36
        $region35: #{_class_block_forward_jit.1} parent=27 // pred_region
          %s274 = sand.u32 %s23, 1
          %s275 = scalar_lea.sflag [#allocation7], %s274
          %s276 = sand.u32 %s59, 1
          %s277 = scalar_lea.vmem [#allocation6], %s276
          %279 = vsyncadd %s275, 0
          %s280 = scalar_lea.hbm %s1, %s23
          %s282 = sshll.u32 %s280, 4
          %s283 = int_to_ptr.hbm [resolvable:$true] %s282
          %s284 = sshll.u32 %s277, 4
          %s285 = int_to_ptr.vmem [resolvable:$true] %s284
          %287 = dma.hbm_to_vmem [thread:$0]  %s283, 16, %s285, %s275
        $region36: #{_class_block_forward_jit.1} parent=27 // pred_fallthru
          _
        // Predicated region
        $region37: #{_class_block_forward_jit.1} parent=27 // pred_check
          %p288 = pneg %p95
        $region38: #{_class_block_forward_jit.1} parent=27 // pred_check_branch
          %290 = sbr.rel (%p288) target = $region40
        $region39: #{_class_block_forward_jit.1} parent=27 // pred_region
          %s291 = sand.u32 %s23, 1
          %s292 = scalar_lea.sflag [#allocation7], %s291
          %s293 = sand.u32 %s85, 1
          %s294 = scalar_lea.vmem [#allocation8], %s293
          %296 = vsyncadd %s292, 0
          %s297 = scalar_lea.hbm %s2, %s23
          %s299 = sshll.u32 %s297, 4
          %s300 = int_to_ptr.hbm [resolvable:$true] %s299
          %s301 = sshll.u32 %s294, 4
          %s302 = int_to_ptr.vmem [resolvable:$true] %s301
          %304 = dma.hbm_to_vmem [thread:$0]  %s300, 16, %s302, %s292
        $region40: #{_class_block_forward_jit.1} parent=27 // pred_fallthru
          _
        // Predicated region
        $region41: #{_class_block_forward_jit.1} parent=27 // pred_check
          %p305 = pneg %p121
        $region42: #{_class_block_forward_jit.1} parent=27 // pred_check_branch
          %307 = sbr.rel (%p305) target = $region44
        $region43: #{_class_block_forward_jit.1} parent=27 // pred_region
          %s308 = sand.u32 %s23, 1
          %s309 = scalar_lea.sflag [#allocation10], %s308
          %s310 = sand.u32 %s111, 1
          %s311 = smul.addr %s310, 64
          %s312 = scalar_lea.vmem [#allocation9], %s311
          %s313 = smul.u32 16, %s23
          %315 = vsyncadd %s309, 0
          %s316 = smul.addr %s313, 4
          %s317 = scalar_lea.hbm %s3, %s316
          %s318 = sshll.u32 %s317, 4
          %s319 = int_to_ptr.hbm [resolvable:$true] %s318
          %s320 = sshll.u32 %s312, 4
          %s321 = int_to_ptr.vmem [resolvable:$true] %s320
          %326 = dma.hbm_to_vmem [thread:$0]  %s319, 1024, %s321, %s309, 64, 64, 4
        $region44: #{_class_block_forward_jit.1} parent=27 // pred_fallthru
          _
      $region28: #{_class_block_forward_jit.1} parent=5 // pred_fallthru
        _
      %p327 = scmp.le.s32.totalorder 1, %s23
      %p328 = scmp.lt.s32.totalorder %s23, 3
      %p329 = pnand %p327, %p328
      %p330 = pneg %p329
      // Predicated region
      $region45: #{_class_block_forward_jit.1} parent=5 // pred_check
        _
      $region46: #{_class_block_forward_jit.1} parent=5 // pred_check_branch
        %332 = sbr.rel (%p329) target = $region48
      $region47: #{_class_block_forward_jit.1} parent=5 // pred_region
        %s333 = ssub.s32 %s23, 1
        %s334 = sand.u32 %s36, 1
        %s335 = scalar_lea.sflag [#allocation4], %s334
        %s336 = sand.u32 %s36, 1
        %s337 = smul.addr %s336, 16
        %s338 = scalar_lea.vmem [#allocation3], %s337
        // Predicated region
        $region49: #{_class_block_forward_jit.1} parent=47 // pred_check
          %p339 = pneg %p49
        $region50: #{_class_block_forward_jit.1} parent=47 // pred_check_branch
          %341 = sbr.rel (%p339) target = $region52
        $region51: #{_class_block_forward_jit.1} parent=47 // pred_region
          %343 = dma.done %s335, 256
        $region52: #{_class_block_forward_jit.1} parent=47 // pred_fallthru
          _
        %s344 = sand.u32 %s28, 1
        %s345 = scalar_lea.sflag [#allocation7], %s344
        %s346 = sand.u32 %s62, 1
        %s347 = scalar_lea.vmem [#allocation6], %s346
        // Predicated region
        $region53: #{_class_block_forward_jit.1} parent=47 // pred_check
          %p348 = pneg %p75
        $region54: #{_class_block_forward_jit.1} parent=47 // pred_check_branch
          %350 = sbr.rel (%p348) target = $region56
        $region55: #{_class_block_forward_jit.1} parent=47 // pred_region
          %352 = dma.done %s345, 16
        $region56: #{_class_block_forward_jit.1} parent=47 // pred_fallthru
          _
        %s353 = sand.u32 %s28, 1
        %s354 = scalar_lea.sflag [#allocation7], %s353
        %s355 = sand.u32 %s88, 1
        %s356 = scalar_lea.vmem [#allocation8], %s355
        // Predicated region
        $region57: #{_class_block_forward_jit.1} parent=47 // pred_check
          %p357 = pneg %p101
        $region58: #{_class_block_forward_jit.1} parent=47 // pred_check_branch
          %359 = sbr.rel (%p357) target = $region60
        $region59: #{_class_block_forward_jit.1} parent=47 // pred_region
          %361 = dma.done %s354, 16
        $region60: #{_class_block_forward_jit.1} parent=47 // pred_fallthru
          _
        %s362 = sand.u32 %s28, 1
        %s363 = scalar_lea.sflag [#allocation10], %s362
        %s364 = sand.u32 %s114, 1
        %s365 = smul.addr %s364, 64
        %s366 = scalar_lea.vmem [#allocation9], %s365
        // Predicated region
        $region61: #{_class_block_forward_jit.1} parent=47 // pred_check
          %p367 = pneg %p127
        $region62: #{_class_block_forward_jit.1} parent=47 // pred_check_branch
          %369 = sbr.rel (%p367) target = $region64
        $region63: #{_class_block_forward_jit.1} parent=47 // pred_region
          %371 = dma.done %s363, 1024
        $region64: #{_class_block_forward_jit.1} parent=47 // pred_fallthru
          _
        // Predicated region
        $region65: #{_class_block_forward_jit.1} parent=47 // pred_check
          %p372 = pneg %p190
        $region66: #{_class_block_forward_jit.1} parent=47 // pred_check_branch
          %374 = sbr.rel (%p372) target = $region68
        $region67: #{_class_block_forward_jit.1} parent=47 // pred_region
          %376 = dma.done [#allocation10], 1024
        $region68: #{_class_block_forward_jit.1} parent=47 // pred_fallthru
          _
        %s377 = sand.u32 %s36, 1
        %s378 = scalar_lea.sflag [#allocation4], %s377
        %s379 = sand.u32 %s36, 1
        %s380 = smul.addr %s379, 16
        %s381 = scalar_lea.vmem [#allocation3], %s380
        %p382 = pneg %p49
        %p383 = pneg %p46
        %s384 = sand.u32 %s28, 1
        %s385 = scalar_lea.sflag [#allocation7], %s384
        %s386 = sand.u32 %s62, 1
        %s387 = scalar_lea.vmem [#allocation6], %s386
        %p388 = pneg %p75
        %p389 = pneg %p72
        %s390 = sand.u32 %s28, 1
        %s391 = scalar_lea.sflag [#allocation7], %s390
        %s392 = sand.u32 %s88, 1
        %s393 = scalar_lea.vmem [#allocation8], %s392
        %p394 = pneg %p101
        %p395 = pneg %p98
        %s396 = sand.u32 %s28, 1
        %s397 = scalar_lea.sflag [#allocation10], %s396
        %s398 = sand.u32 %s114, 1
        %s399 = smul.addr %s398, 64
        %s400 = scalar_lea.vmem [#allocation9], %s399
        %p401 = pneg %p127
        %p402 = pneg %p124
        %p403 = pneg %p148
        %p404 = pneg %p145
        %p405 = pneg %p169
        %p406 = pneg %p166
        %p407 = pneg %p190
        %p408 = pneg %p187
        %p409 = pneg %p211
        %p410 = pneg %p208
        %s411 = smul.u32 16, %s28
        %v412 = vld [vmem:[%s338] sm:$0xff]
        %v413 = vld [vmem:[%s338 + $0x8] sm:$0xff]
        %v414 = vadd.f32 %v412, %v413
        %v415 = vrot.slane %v414, 4
        %v416 = vadd.f32 %v414, %v415
        %v417 = vrot.slane %v416, 2
        %v418 = vadd.f32 %v416, %v417
        %v419 = vrot.slane %v418, 1
        %v420 = vadd.f32 %v418, %v419
        %v421 = vmul.f32 %v420, 0.0625
        %v422 = vsub.f32 %v412, %v421
        %v423 = vsub.f32 %v413, %v421
        %v424 = vmul.f32 %v422, %v422
        %v425 = vmul.f32 %v423, %v423
        %v426 = vadd.f32 %v424, %v425
        %v427 = vrot.slane %v426, 4
        %v428 = vadd.f32 %v426, %v427
        %v429 = vrot.slane %v428, 2
        %v430 = vadd.f32 %v428, %v429
        %v431 = vrot.slane %v430, 1
        %v432 = vadd.f32 %v430, %v431
        %v433 = vmul.f32 %v432, 0.0625
        %v434 = vld [vmem:[%s347] sm:$0x1]
        %v435 = vadd.f32 %v433, 1e-05
        %v436 = vrsqrt.pop %v435
        %v437 = vmul.f32 %v436, %v435
        %v438 = vmul.f32 %v437, %v436
        %v439 = vmul.f32 0.5, %v438
        %v440 = vsub.f32 1.5, %v439
        %v441 = vmul.f32 %v436, %v440
        %vm442 = vweird.f32 %v435
        %vm443 = vweird.f32 %v436
        %vm444 = vmor %vm442, %vm443
        %v445 = vsel %vm444, %v436, %v441
        %v446 = vmul.f32 %v434, %v445
        %v448 = vperm.slane %v446, 0
        %v450 = vmul.f32 %v422, %v448
        %v451 = vmul.f32 %v423, %v448
        %v452 = vld [vmem:[%s356] sm:$0x1]
        %v454 = vperm.slane %v452, 0
        %v456 = vadd.f32 %v450, %v454
        %v457 = vadd.f32 %v451, %v454
        %v458 = vmul.f32 %v456, 0.1
        %v459 = vmul.f32 %v457, 0.1
        %v460 = vmax.f32 %v456, %v458
        %v461 = vmax.f32 %v457, %v459
        %v462 = vpack.c.bf16 %v461, %v460
        %v463 = vld [vmem:[%s366] sm:$0xf]
        %v464 = vld [vmem:[%s366 + $0x4] sm:$0xf]
        %v465 = vld [vmem:[%s366 + $0x8] sm:$0xf]
        %v466 = vld [vmem:[%s366 + $0xc] sm:$0xf]
        %v467 = vld [vmem:[%s366 + $0x10] sm:$0xf]
        %v468 = vld [vmem:[%s366 + $0x14] sm:$0xf]
        %v469 = vld [vmem:[%s366 + $0x18] sm:$0xf]
        %v470 = vld [vmem:[%s366 + $0x1c] sm:$0xf]
        %v471 = vld [vmem:[%s366 + $0x20] sm:$0xf]
        %v472 = vld [vmem:[%s366 + $0x24] sm:$0xf]
        %v473 = vld [vmem:[%s366 + $0x28] sm:$0xf]
        %v474 = vld [vmem:[%s366 + $0x2c] sm:$0xf]
        %v475 = vld [vmem:[%s366 + $0x30] sm:$0xf]
        %v476 = vld [vmem:[%s366 + $0x34] sm:$0xf]
        %v477 = vld [vmem:[%s366 + $0x38] sm:$0xf]
        %v478 = vld [vmem:[%s366 + $0x3c] sm:$0xf]
        %v495 = vunpack.c.l.b16 %v463
        %v496 = vunpack.c.l.b16 %v464
        %v497 = vunpack.c.l.b16 %v465
        %v498 = vunpack.c.l.b16 %v466
        %v499 = vunpack.c.l.b16 %v467
        %v500 = vunpack.c.l.b16 %v468
        %v501 = vunpack.c.l.b16 %v469
        %v502 = vunpack.c.l.b16 %v470
        %v503 = vunpack.c.l.b16 %v471
        %v504 = vunpack.c.l.b16 %v472
        %v505 = vunpack.c.l.b16 %v473
        %v506 = vunpack.c.l.b16 %v474
        %v507 = vunpack.c.l.b16 %v475
        %v508 = vunpack.c.l.b16 %v476
        %v509 = vunpack.c.l.b16 %v477
        %v510 = vunpack.c.l.b16 %v478
        %v511 = vpack.c.b16 %v496, %v495
        %v512 = vpack.c.b16 %v498, %v497
        %v513 = vpack.c.b16 %v500, %v499
        %v514 = vpack.c.b16 %v502, %v501
        %v515 = vpack.c.b16 %v504, %v503
        %v516 = vpack.c.b16 %v506, %v505
        %v517 = vpack.c.b16 %v508, %v507
        %v518 = vpack.c.b16 %v510, %v509
        %527 = vmatpush.bf16.msra.mxu0 %v518
        %528 = vmatpush.bf16.msra.mxu0 %v517
        %529 = vmatpush.bf16.msra.mxu0 %v516
        %530 = vmatpush.bf16.msra.mxu0 %v515
        %531 = vmatpush.bf16.msra.mxu0 %v514
        %532 = vmatpush.bf16.msra.mxu0 %v513
        %533 = vmatpush.bf16.msra.mxu0 %v512
        %534 = vmatpush.bf16.msra.mxu0 %v511
        %535 = vmatmul.bf16.gmra.mxu0 %v462
        %v536 = vpop.f32.mrf.mxu0
        %v537 = vadd.f32 0.0, %v536
        %v538 = vpop.f32.mrf.mxu0
        %v539 = vadd.f32 0.0, %v538
        %540 = vdwg.mxu0
        %p541 = scmp.eq.s32.totalorder %s28, 0
        // Predicated region
        $region69: #{_class_block_forward_jit.1} parent=47 // pred_check
          %p542 = pneg %p541
        $region70: #{_class_block_forward_jit.1} parent=47 // pred_check_branch
          %544 = sbr.rel (%p542) target = $region72
        $region71: #{_class_block_forward_jit.1} parent=47 // pred_region
          %545 = vst [vmem:[#allocation2] sm:$0xff] %v537
          %546 = vst [vmem:[#allocation2 + $0x8] sm:$0xff] %v539
        $region72: #{_class_block_forward_jit.1} parent=47 // pred_fallthru
          _
        %p547 = scmp.ne.s32.totalorder %s28, 0
        // Predicated region
        $region73: #{_class_block_forward_jit.1} parent=47 // pred_check
          %p548 = pneg %p547
        $region74: #{_class_block_forward_jit.1} parent=47 // pred_check_branch
          %550 = sbr.rel (%p548) target = $region76
        $region75: #{_class_block_forward_jit.1} parent=47 // pred_region
          %v551 = vld [vmem:[#allocation2] sm:$0xff]
          %v552 = vld [vmem:[#allocation2 + $0x8] sm:$0xff]
          %v553 = vadd.f32 %v551, %v537
          %v554 = vadd.f32 %v552, %v539
          %555 = vst [vmem:[#allocation2] sm:$0xff] %v553
          %556 = vst [vmem:[#allocation2 + $0x8] sm:$0xff] %v554
        $region76: #{_class_block_forward_jit.1} parent=47 // pred_fallthru
          _
        %p557 = scmp.eq.s32.totalorder %s28, 1
        // Predicated region
        $region77: #{_class_block_forward_jit.1} parent=47 // pred_check
          %p558 = pneg %p557
        $region78: #{_class_block_forward_jit.1} parent=47 // pred_check_branch
          %560 = sbr.rel (%p558) target = $region80
        $region79: #{_class_block_forward_jit.1} parent=47 // pred_region
          %v561 = vld [vmem:[#allocation2] sm:$0xff]
          %v562 = vld [vmem:[#allocation2 + $0x8] sm:$0xff]
          %v563 = vadd.f32 %v561, %v562
          %v564 = vrot.slane %v563, 4
          %v565 = vadd.f32 %v563, %v564
          %v566 = vrot.slane %v565, 2
          %v567 = vadd.f32 %v565, %v566
          %v568 = vrot.slane %v567, 1
          %v569 = vadd.f32 %v567, %v568
          %v570 = vmul.f32 %v569, 0.0625
          %v571 = vsub.f32 %v561, %v570
          %v572 = vsub.f32 %v562, %v570
          %v573 = vmul.f32 %v571, %v571
          %v574 = vmul.f32 %v572, %v572
          %v575 = vadd.f32 %v573, %v574
          %v576 = vrot.slane %v575, 4
          %v577 = vadd.f32 %v575, %v576
          %v578 = vrot.slane %v577, 2
          %v579 = vadd.f32 %v577, %v578
          %v580 = vrot.slane %v579, 1
          %v581 = vadd.f32 %v579, %v580
          %v582 = vmul.f32 %v581, 0.0625
          %v583 = vld [vmem:[%s4] sm:$0x1]
          %v584 = vadd.f32 %v582, 1e-05
          %v585 = vrsqrt.pop %v584
          %v586 = vmul.f32 %v585, %v584
          %v587 = vmul.f32 %v586, %v585
          %v588 = vmul.f32 0.5, %v587
          %v589 = vsub.f32 1.5, %v588
          %v590 = vmul.f32 %v585, %v589
          %vm591 = vweird.f32 %v584
          %vm592 = vweird.f32 %v585
          %vm593 = vmor %vm591, %vm592
          %v594 = vsel %vm593, %v585, %v590
          %v595 = vmul.f32 %v583, %v594
          %v597 = vperm.slane %v595, 0
          %v599 = vmul.f32 %v571, %v597
          %v600 = vmul.f32 %v572, %v597
          %v601 = vld [vmem:[%s5] sm:$0x1]
          %v603 = vperm.slane %v601, 0
          %v605 = vadd.f32 %v599, %v603
          %v606 = vadd.f32 %v600, %v603
          %v607 = vpack.c.bf16 %v606, %v605
          %v608 = vld [vmem:[#allocation11] sm:$0xf]
          %v609 = vld [vmem:[#allocation11 + $0x4] sm:$0xf]
          %v610 = vld [vmem:[#allocation11 + $0x8] sm:$0xf]
          %v611 = vld [vmem:[#allocation11 + $0xc] sm:$0xf]
          %v612 = vld [vmem:[#allocation11 + $0x10] sm:$0xf]
          %v613 = vld [vmem:[#allocation11 + $0x14] sm:$0xf]
          %v614 = vld [vmem:[#allocation11 + $0x18] sm:$0xf]
          %v615 = vld [vmem:[#allocation11 + $0x1c] sm:$0xf]
          %v616 = vld [vmem:[#allocation11 + $0x20] sm:$0xf]
          %v617 = vld [vmem:[#allocation11 + $0x24] sm:$0xf]
          %v618 = vld [vmem:[#allocation11 + $0x28] sm:$0xf]
          %v619 = vld [vmem:[#allocation11 + $0x2c] sm:$0xf]
          %v620 = vld [vmem:[#allocation11 + $0x30] sm:$0xf]
          %v621 = vld [vmem:[#allocation11 + $0x34] sm:$0xf]
          %v622 = vld [vmem:[#allocation11 + $0x38] sm:$0xf]
          %v623 = vld [vmem:[#allocation11 + $0x3c] sm:$0xf]
          %v640 = vunpack.c.l.b16 %v608
          %v641 = vunpack.c.l.b16 %v609
          %v642 = vunpack.c.l.b16 %v610
          %v643 = vunpack.c.l.b16 %v611
          %v644 = vunpack.c.l.b16 %v612
          %v645 = vunpack.c.l.b16 %v613
          %v646 = vunpack.c.l.b16 %v614
          %v647 = vunpack.c.l.b16 %v615
          %v648 = vunpack.c.l.b16 %v616
          %v649 = vunpack.c.l.b16 %v617
          %v650 = vunpack.c.l.b16 %v618
          %v651 = vunpack.c.l.b16 %v619
          %v652 = vunpack.c.l.b16 %v620
          %v653 = vunpack.c.l.b16 %v621
          %v654 = vunpack.c.l.b16 %v622
          %v655 = vunpack.c.l.b16 %v623
          %v656 = vpack.c.b16 %v641, %v640
          %v657 = vpack.c.b16 %v643, %v642
          %v658 = vpack.c.b16 %v645, %v644
          %v659 = vpack.c.b16 %v647, %v646
          %v660 = vpack.c.b16 %v649, %v648
          %v661 = vpack.c.b16 %v651, %v650
          %v662 = vpack.c.b16 %v653, %v652
          %v663 = vpack.c.b16 %v655, %v654
          %672 = vmatpush.bf16.msra.mxu0 %v663
          %673 = vmatpush.bf16.msra.mxu0 %v662
          %674 = vmatpush.bf16.msra.mxu0 %v661
          %675 = vmatpush.bf16.msra.mxu0 %v660
          %676 = vmatpush.bf16.msra.mxu0 %v659
          %677 = vmatpush.bf16.msra.mxu0 %v658
          %678 = vmatpush.bf16.msra.mxu0 %v657
          %679 = vmatpush.bf16.msra.mxu0 %v656
          %680 = vmatmul.bf16.gmra.mxu0 %v607
          %v681 = vpop.f32.mrf.mxu0
          %v682 = vadd.f32 0.0, %v681
          %v683 = vpop.f32.mrf.mxu0
          %v684 = vadd.f32 0.0, %v683
          %685 = vdwg.mxu0
          %686 = vst [vmem:[#allocation12] sm:$0xff] %v682
          %687 = vst [vmem:[#allocation12 + $0x8] sm:$0xff] %v684
        $region80: #{_class_block_forward_jit.1} parent=47 // pred_fallthru
          _
        // Predicated region
        $region81: #{_class_block_forward_jit.1} parent=47 // pred_check
          %p688 = pneg %p208
        $region82: #{_class_block_forward_jit.1} parent=47 // pred_check_branch
          %690 = sbr.rel (%p688) target = $region84
        $region83: #{_class_block_forward_jit.1} parent=47 // pred_region
          %692 = vsyncadd [#allocation5], 0
          %s693 = sshll.u32 [#allocation12], 4
          %s694 = int_to_ptr.vmem [resolvable:$true] %s693
          %s695 = sshll.u32 %s7, 4
          %s696 = int_to_ptr.hbm [resolvable:$true] %s695
          %701 = dma.vmem_to_hbm [thread:$0]  %s694, 256, %s696, [#allocation5], 128, 128, 8
        $region84: #{_class_block_forward_jit.1} parent=47 // pred_fallthru
          _
        // Predicated region
        $region85: #{_class_block_forward_jit.1} parent=47 // pred_check
          %p702 = pneg %p208
        $region86: #{_class_block_forward_jit.1} parent=47 // pred_check_branch
          %704 = sbr.rel (%p702) target = $region88
        $region87: #{_class_block_forward_jit.1} parent=47 // pred_region
          %706 = dma.done [#allocation5], 256
        $region88: #{_class_block_forward_jit.1} parent=47 // pred_fallthru
          _
      $region48: #{_class_block_forward_jit.1} parent=5 // pred_fallthru
        _
      %p707 = scmp.le.s32.totalorder 2, %s23
      // Predicated region
      $region89: #{_class_block_forward_jit.1} parent=5 // pred_check
        %p708 = pneg %p707
      $region90: #{_class_block_forward_jit.1} parent=5 // pred_check_branch
        %710 = sbr.rel (%p708) target = $region92
      $region91: #{_class_block_forward_jit.1} parent=5 // pred_region
        %s711 = ssub.s32 %s23, 2
      $region92: #{_class_block_forward_jit.1} parent=5 // pred_fallthru
        _
    $region6: #{_class_block_forward_jit.1} parent=1 // loop_footer
      %s27 = sadd.s32 1, %s23
    $region7: #{_class_block_forward_jit.1} parent=1 // loop_footer_branch
      %22 = sbr.rel target = $region3
    $region8: #{_class_block_forward_jit.1} parent=1 // loop_exit
      _
    %712 = vsyncpa [#allocation4], 1
    %s713 = scalar_lea.sflag [#allocation4], 1
    %714 = vsyncpa %s713, 1
    %715 = vsyncpa [#allocation7], 1
    %s716 = scalar_lea.sflag [#allocation7], 1
    %717 = vsyncpa %s716, 1
    %718 = vsyncpa [#allocation10], 1
    %s719 = scalar_lea.sflag [#allocation10], 1
    %720 = vsyncpa %s719, 1
    %721 = vsyncpa [#allocation5], 1
    %s722 = scalar_lea.sflag [#allocation5], 1
    %723 = vsyncpa %s722, 1

</llo_original>
